<compile_context>
chip_gen: v6e
topology: v6e:2x2x1
jax: 0.10.0
libtpu: 0.0.40
codegen_flags: <defaults>
</compile_context>

<pallas_src>
import jax
import jax.numpy as jnp
from jax.experimental import pallas as pl
from jax.experimental.pallas import tpu as pltpu


def make_selection_matrix(seenclasses, n_class_all):
    """One-hot selection matrix: sel[c, j] = 1 iff seenclasses[j] == c.

    emb @ sel == torch.index_select(emb, 1, seenclasses) (order preserving,
    exact in f32).  Precompute ONCE per `seenclasses` set and reuse it across
    forward calls (hoisted out of the hot path).
    """
    return (jnp.arange(n_class_all, dtype=jnp.int32)[:, None]
            == seenclasses[None, :].astype(jnp.int32)).astype(jnp.float32)


def _f_mlp_kernel(x_ref, w1_ref, b1_ref, w2_ref, b2_ref, sel_ref,
                  o_ref, bi_ref, kl_ref):
    # fc1 on the MXU: cast x->bf16 in-kernel (VPU slot, free), f32 accumulate.
    x_bf = x_ref[...].astype(jnp.bfloat16)
    emb = jnp.dot(x_bf, w1_ref[...],
                  preferred_element_type=jnp.float32) + b1_ref[...]      # [TB, C] f32

    # log_softmax over classes (all vector math in f32).
    m = jnp.max(emb, axis=1, keepdims=True)                              # XLU row max
    shifted = emb - m
    e = jnp.exp(shifted)                                                 # EUP
    o = shifted - jnp.log(jnp.sum(e, axis=1, keepdims=True))             # [TB, C]
    o_ref[...] = o

    # fc2 on the log-softmax output.  [C, 2] is tiny -> keep it exact in f32.
    bi_ref[...] = jnp.dot(o, w2_ref[...],
                          preferred_element_type=jnp.float32) + b2_ref[...]   # [TB, 2]

    # kl_input = softmax(index_select(emb, 1, seenclasses)).
    # Gather the seen columns first (exact f32 one-hot matmul) and run a
    # standard softmax with its OWN max: robust when the seen logits sit far
    # below the global row max (exp-reuse shortcut would give 0/0 = NaN).
    emb_seen = jnp.dot(emb, sel_ref[...],
                       preferred_element_type=jnp.float32)               # [TB, n_seen]
    ms = jnp.max(emb_seen, axis=1, keepdims=True)
    es = jnp.exp(emb_seen - ms)
    kl_ref[...] = es / jnp.sum(es, axis=1, keepdims=True)
    # (pl.reciprocal(..., approx=True) is possible here but the win is nil at
    #  [TB,1] and it eats into the 5e-4 tolerance; kept exact.)


def _pick_tile_b(B):
    """Batch tile: biggest divisor of B that is a multiple of 8 and <= 512,
    preferring >= 2 grid steps so v7x's two TensorCores both get work, while
    staying large enough to amortize the ~0.35 us per-step overhead on the
    single-TC v5e/v6e chips."""
    if B % 8 != 0 or B <= 8:
        return B                      # whole batch in one tile (block == full dim)
    upper = min(B // 2, 512) if B >= 16 else B
    upper -= upper % 8
    for t in range(upper, 7, -8):
        if B % t == 0:
            return t
    return B


def f_mlp_forward(x, w1, b1, w2, b2, sel):
    """Fused forward of F_MLP.forward(x, seenclasses, _unused_unseenclasses).

    Weights are [in, out] (transpose of nn.Linear.weight).  `sel` is the
    precomputed one-hot selection matrix from make_selection_matrix().
    Returns (o, bi_feature, kl_input), all float32.
    """
    B, E = x.shape
    C = w1.shape[1]
    n_seen = sel.shape[1]

    tile_b = _pick_tile_b(B)
    grid = (B // tile_b,) if B % tile_b == 0 else (1,)

    # bf16 operands for the big matmul weight only; x streams as f32 and is
    # cast in-kernel.  Biases / softmax math stay f32.
    w1b = w1.astype(jnp.bfloat16)
    b1_2d = b1.reshape(1, C).astype(jnp.float32)
    w2_f = w2.astype(jnp.float32)
    b2_2d = b2.reshape(1, 2).astype(jnp.float32)
    sel_f = sel.astype(jnp.float32)

    def resident(shape):
        # Constant block index -> no re-DMA across grid steps.  (Could also add
        # pipeline_mode=pl.Buffered(1) to drop the second buffer; negligible at
        # these sizes.)
        return pl.BlockSpec(shape, lambda i: (0, 0))

    out = pl.pallas_call(
        _f_mlp_kernel,
        out_shape=(jax.ShapeDtypeStruct((B, C), jnp.float32),
                   jax.ShapeDtypeStruct((B, 2), jnp.float32),
                   jax.ShapeDtypeStruct((B, n_seen), jnp.float32)),
        grid=grid,
        in_specs=[pl.BlockSpec((tile_b, E), lambda i: (i, 0)),    # x streamed per tile
                  resident(w1b.shape), resident(b1_2d.shape),     # weights stay resident
                  resident(w2_f.shape), resident(b2_2d.shape),
                  resident(sel_f.shape)],
        out_specs=(pl.BlockSpec((tile_b, C), lambda i: (i, 0)),
                   pl.BlockSpec((tile_b, 2), lambda i: (i, 0)),
                   pl.BlockSpec((tile_b, n_seen), lambda i: (i, 0))),
        compiler_params=pltpu.CompilerParams(
            # "parallel" is safe on all generations; on v7x, CORE_PARALLEL can
            # be tried for explicit 2-TC sharding of the batch axis.
            dimension_semantics=("parallel",)),
    )(x.astype(jnp.float32), w1b, b1_2d, w2_f, b2_2d, sel_f)

    o, bi_feature, kl_input = out
    return o, bi_feature, kl_input


if __name__ == "__main__":
    # Shapes consistent with the module: embedSize=32, n_class_all=16,
    # 10 "seen" classes.  Batch 256 so the batch grid tiles into 2 steps of
    # 128 and can shard across v7x's two TensorCores.
    B, E, C, n_seen = 256, 32, 16, 10

    key = jax.random.PRNGKey(0)
    k1, k2, k3, k4, k5, k6 = jax.random.split(key, 6)

    x = jax.random.normal(k1, (B, E), dtype=jnp.float32)
    w1 = jax.random.normal(k2, (E, C), dtype=jnp.float32) * 0.1   # fc1 weight [in, out]
    b1 = jax.random.normal(k3, (C,), dtype=jnp.float32) * 0.1     # fc1 bias
    w2 = jax.random.normal(k4, (C, 2), dtype=jnp.float32) * 0.1   # fc2 weight [in, out]
    b2 = jax.random.normal(k5, (2,), dtype=jnp.float32) * 0.1     # fc2 bias
    seenclasses = jax.random.permutation(
        k6, jnp.arange(C, dtype=jnp.int32))[:n_seen]

    # Hoisted: build the selection matrix once per seenclasses set.
    sel = make_selection_matrix(seenclasses, C)

    fwd = jax.jit(f_mlp_forward)
    o, bi, kl = fwd(x, w1, b1, w2, b2, sel)
    jax.block_until_ready((o, bi, kl))

    assert o.shape == (B, C) and bi.shape == (B, 2) and kl.shape == (B, n_seen)

    # Strict check: same bf16-fc1 / f32-elsewhere recipe as the kernel.
    xb, w1b = x.astype(jnp.bfloat16), w1.astype(jnp.bfloat16)
    emb_bf = jnp.dot(xb, w1b, preferred_element_type=jnp.float32) + b1
    o_bf = jax.nn.log_softmax(emb_bf, axis=1)
    bi_bf = o_bf @ w2 + b2
    kl_bf = jax.nn.softmax(emb_bf[:, seenclasses], axis=1)
    assert jnp.allclose(o, o_bf, atol=5e-4), float(jnp.max(jnp.abs(o - o_bf)))
    assert jnp.allclose(bi, bi_bf, atol=5e-4), float(jnp.max(jnp.abs(bi - bi_bf)))
    assert jnp.allclose(kl, kl_bf, atol=5e-4), float(jnp.max(jnp.abs(kl - kl_bf)))

    # Loose check: exact f32 PyTorch semantics (only bf16 fc1 drift expected).
    emb32 = x @ w1 + b1
    o32 = jax.nn.log_softmax(emb32, axis=1)
    bi32 = o32 @ w2 + b2
    kl32 = jax.nn.softmax(emb32[:, seenclasses], axis=1)
    assert jnp.allclose(o, o32, atol=1e-1)
    assert jnp.allclose(bi, bi32, atol=1e-1)
    assert jnp.allclose(kl, kl32, atol=1e-1)

    print("KERNEL_OK")
</pallas_src>

<mosaic_0001>
module attributes {stable_mosaic.version = 11 : i64} {
  func.func @_f_mlp_kernel(%arg0: i32, %arg1: memref<128x32xf32, #tpu.memory_space<vmem>>, %arg2: memref<32x16xbf16, #tpu.memory_space<vmem>>, %arg3: memref<1x16xf32, #tpu.memory_space<vmem>>, %arg4: memref<16x2xf32, #tpu.memory_space<vmem>>, %arg5: memref<1x2xf32, #tpu.memory_space<vmem>>, %arg6: memref<16x10xf32, #tpu.memory_space<vmem>>, %arg7: memref<128x16xf32, #tpu.memory_space<vmem>>, %arg8: memref<128x2xf32, #tpu.memory_space<vmem>>, %arg9: memref<128x10xf32, #tpu.memory_space<vmem>>) attributes {dimension_semantics = [#tpu.dimension_semantics<parallel>], iteration_bounds = array<i64: 2>, scalar_prefetch = 0 : i64, scratch_operands = 0 : i64, tpu.core_type = #tpu.core_type<tc>, window_params = [{transform_indices = @transform_0, window_bounds = array<i64: 128, 32>}, {pipeline_mode = #tpu.pipeline_mode<synchronous>, transform_indices = @transform_1, window_bounds = array<i64: 32, 16>}, {pipeline_mode = #tpu.pipeline_mode<synchronous>, transform_indices = @transform_2, window_bounds = array<i64: 1, 16>}, {pipeline_mode = #tpu.pipeline_mode<synchronous>, transform_indices = @transform_3, window_bounds = array<i64: 16, 2>}, {pipeline_mode = #tpu.pipeline_mode<synchronous>, transform_indices = @transform_4, window_bounds = array<i64: 1, 2>}, {pipeline_mode = #tpu.pipeline_mode<synchronous>, transform_indices = @transform_5, window_bounds = array<i64: 16, 10>}, {transform_indices = @transform_6, window_bounds = array<i64: 128, 16>}, {transform_indices = @transform_7, window_bounds = array<i64: 128, 2>}, {transform_indices = @transform_8, window_bounds = array<i64: 128, 10>}]} {
    %c0 = arith.constant 0 : index
    %c0_0 = arith.constant 0 : index
    %0 = vector.load %arg1[%c0, %c0_0] : memref<128x32xf32, #tpu.memory_space<vmem>>, vector<128x32xf32>
    %1 = arith.truncf %0 : vector<128x32xf32> to vector<128x32xbf16>
    %c0_1 = arith.constant 0 : index
    %c0_2 = arith.constant 0 : index
    %2 = vector.load %arg2[%c0_1, %c0_2] : memref<32x16xbf16, #tpu.memory_space<vmem>>, vector<32x16xbf16>
    %cst = arith.constant dense<0.000000e+00> : vector<128x16xf32>
    %3 = tpu.matmul %1, %2, %cst {dimension_numbers = #tpu.dot_dimension_numbers<[1], [0], [0], [1], [0, 0, 1, 1], [], []>} : vector<128x32xbf16>, vector<32x16xbf16>, vector<128x16xf32> -> vector<128x16xf32>
    %c0_3 = arith.constant 0 : index
    %c0_4 = arith.constant 0 : index
    %4 = vector.load %arg3[%c0_3, %c0_4] : memref<1x16xf32, #tpu.memory_space<vmem>>, vector<1x16xf32>
    %5 = vector.broadcast %4 : vector<1x16xf32> to vector<128x16xf32>
    %6 = arith.addf %3, %5 : vector<128x16xf32>
    %cst_5 = arith.constant dense<0xFF800000> : vector<128xf32>
    %7 = vector.multi_reduction <maximumf>, %6, %cst_5 [1] : vector<128x16xf32> to vector<128xf32>
    %8 = vector.shape_cast %7 : vector<128xf32> to vector<128x1xf32>
    %9 = vector.broadcast %8 : vector<128x1xf32> to vector<128x16xf32>
    %10 = arith.subf %6, %9 : vector<128x16xf32>
    %11 = math.exp %10 : vector<128x16xf32>
    %cst_6 = arith.constant dense<0.000000e+00> : vector<128xf32>
    %12 = vector.multi_reduction <add>, %11, %cst_6 [1] : vector<128x16xf32> to vector<128xf32>
    %13 = vector.shape_cast %12 : vector<128xf32> to vector<128x1xf32>
    %14 = math.log %13 : vector<128x1xf32>
    %15 = vector.broadcast %14 : vector<128x1xf32> to vector<128x16xf32>
    %16 = arith.subf %10, %15 : vector<128x16xf32>
    %c0_7 = arith.constant 0 : index
    %c0_8 = arith.constant 0 : index
    %17 = vector.load %arg7[%c0_7, %c0_8] : memref<128x16xf32, #tpu.memory_space<vmem>>, vector<128x16xf32>
    tpu.vector_store %arg7[%c0_7, %c0_8], %16 {strides = array<i32>} : memref<128x16xf32, #tpu.memory_space<vmem>>, vector<128x16xf32>,
    %c0_9 = arith.constant 0 : index
    %c0_10 = arith.constant 0 : index
    %18 = vector.load %arg4[%c0_9, %c0_10] : memref<16x2xf32, #tpu.memory_space<vmem>>, vector<16x2xf32>
    %cst_11 = arith.constant dense<0.000000e+00> : vector<128x2xf32>
    %19 = tpu.matmul %16, %18, %cst_11 {dimension_numbers = #tpu.dot_dimension_numbers<[1], [0], [0], [1], [0, 0, 1, 1], [], []>} : vector<128x16xf32>, vector<16x2xf32>, vector<128x2xf32> -> vector<128x2xf32>
    %c0_12 = arith.constant 0 : index
    %c0_13 = arith.constant 0 : index
    %20 = vector.load %arg5[%c0_12, %c0_13] : memref<1x2xf32, #tpu.memory_space<vmem>>, vector<1x2xf32>
    %21 = vector.broadcast %20 : vector<1x2xf32> to vector<128x2xf32>
    %22 = arith.addf %19, %21 : vector<128x2xf32>
    %c0_14 = arith.constant 0 : index
    %c0_15 = arith.constant 0 : index
    %23 = vector.load %arg8[%c0_14, %c0_15] : memref<128x2xf32, #tpu.memory_space<vmem>>, vector<128x2xf32>
    tpu.vector_store %arg8[%c0_14, %c0_15], %22 {strides = array<i32>} : memref<128x2xf32, #tpu.memory_space<vmem>>, vector<128x2xf32>,
    %c0_16 = arith.constant 0 : index
    %c0_17 = arith.constant 0 : index
    %24 = vector.load %arg6[%c0_16, %c0_17] : memref<16x10xf32, #tpu.memory_space<vmem>>, vector<16x10xf32>
    %cst_18 = arith.constant dense<0.000000e+00> : vector<128x10xf32>
    %25 = tpu.matmul %6, %24, %cst_18 {dimension_numbers = #tpu.dot_dimension_numbers<[1], [0], [0], [1], [0, 0, 1, 1], [], []>} : vector<128x16xf32>, vector<16x10xf32>, vector<128x10xf32> -> vector<128x10xf32>
    %cst_19 = arith.constant dense<0xFF800000> : vector<128xf32>
    %26 = vector.multi_reduction <maximumf>, %25, %cst_19 [1] : vector<128x10xf32> to vector<128xf32>
    %27 = vector.shape_cast %26 : vector<128xf32> to vector<128x1xf32>
    %28 = vector.broadcast %27 : vector<128x1xf32> to vector<128x10xf32>
    %29 = arith.subf %25, %28 : vector<128x10xf32>
    %30 = math.exp %29 : vector<128x10xf32>
    %cst_20 = arith.constant dense<0.000000e+00> : vector<128xf32>
    %31 = vector.multi_reduction <add>, %30, %cst_20 [1] : vector<128x10xf32> to vector<128xf32>
    %32 = vector.shape_cast %31 : vector<128xf32> to vector<128x1xf32>
    %33 = vector.broadcast %32 : vector<128x1xf32> to vector<128x10xf32>
    %34 = arith.divf %30, %33 : vector<128x10xf32>
    %c0_21 = arith.constant 0 : index
    %c0_22 = arith.constant 0 : index
    %35 = vector.load %arg9[%c0_21, %c0_22] : memref<128x10xf32, #tpu.memory_space<vmem>>, vector<128x10xf32>
    tpu.vector_store %arg9[%c0_21, %c0_22], %34 {strides = array<i32>} : memref<128x10xf32, #tpu.memory_space<vmem>>, vector<128x10xf32>,
    return
  }
  func.func @transform_0(%arg0: i32) -> (i32, i32) {
    %c0_i32 = arith.constant 0 : i32
    %c0_i32_0 = arith.constant 0 : i32
    return %arg0, %c0_i32 : i32, i32
  }
  func.func @transform_1(%arg0: i32) -> (i32, i32) {
    %c0_i32 = arith.constant 0 : i32
    %c0_i32_0 = arith.constant 0 : i32
    %c0_i32_1 = arith.constant 0 : i32
    return %c0_i32, %c0_i32_0 : i32, i32
  }
  func.func @transform_2(%arg0: i32) -> (i32, i32) {
    %c0_i32 = arith.constant 0 : i32
    %c0_i32_0 = arith.constant 0 : i32
    %c0_i32_1 = arith.constant 0 : i32
    return %c0_i32, %c0_i32_0 : i32, i32
  }
  func.func @transform_3(%arg0: i32) -> (i32, i32) {
    %c0_i32 = arith.constant 0 : i32
    %c0_i32_0 = arith.constant 0 : i32
    %c0_i32_1 = arith.constant 0 : i32
    return %c0_i32, %c0_i32_0 : i32, i32
  }
  func.func @transform_4(%arg0: i32) -> (i32, i32) {
    %c0_i32 = arith.constant 0 : i32
    %c0_i32_0 = arith.constant 0 : i32
    %c0_i32_1 = arith.constant 0 : i32
    return %c0_i32, %c0_i32_0 : i32, i32
  }
  func.func @transform_5(%arg0: i32) -> (i32, i32) {
    %c0_i32 = arith.constant 0 : i32
    %c0_i32_0 = arith.constant 0 : i32
    %c0_i32_1 = arith.constant 0 : i32
    return %c0_i32, %c0_i32_0 : i32, i32
  }
  func.func @transform_6(%arg0: i32) -> (i32, i32) {
    %c0_i32 = arith.constant 0 : i32
    %c0_i32_0 = arith.constant 0 : i32
    return %arg0, %c0_i32 : i32, i32
  }
  func.func @transform_7(%arg0: i32) -> (i32, i32) {
    %c0_i32 = arith.constant 0 : i32
    %c0_i32_0 = arith.constant 0 : i32
    return %arg0, %c0_i32 : i32, i32
  }
  func.func @transform_8(%arg0: i32) -> (i32, i32) {
    %c0_i32 = arith.constant 0 : i32
    %c0_i32_0 = arith.constant 0 : i32
    return %arg0, %c0_i32 : i32, i32
  }
}

</mosaic_0001>

<llo_original>
// kernel: f_mlp_forward.1
$region0: #{f_mlp_forward.1}
  #allocation0 [shape = 'u32[]', space=smem, size = 0x4, offset = 0x4, fixed_abs, tag = 'smem constant byte address 0x4 - core index']
  #allocation1 [shape = 'u32[144,128]{1,0:T(1,128)}', space=vmem, size = 0x12000, scoped, tag = 'internal scratch']
  %s0 = inlined_call_operand.vmem [shape: f32[256,32], index: 0, kind: input, shape index: {}]
  %s1 = inlined_call_operand.vmem [shape: bf16[32,16], index: 1, kind: input, shape index: {}]
  %s2 = inlined_call_operand.vmem [shape: f32[1,16], index: 2, kind: input, shape index: {}]
  %s3 = inlined_call_operand.vmem [shape: f32[16,2], index: 3, kind: input, shape index: {}]
  %s4 = inlined_call_operand.vmem [shape: f32[1,2], index: 4, kind: input, shape index: {}]
  %s5 = inlined_call_operand.vmem [shape: f32[16,10], index: 5, kind: input, shape index: {}]
  %s6 = inlined_call_operand.vmem [shape: f32[256,16], index: 6, kind: output, shape index: {0}]
  %s7 = inlined_call_operand.vmem [shape: f32[256,2], index: 7, kind: output, shape index: {1}]
  %s8 = inlined_call_operand.vmem [shape: f32[256,10], index: 8, kind: output, shape index: {2}]
  %9 = xla_tuple %s6, %s7, %s8
  %s10 = sld [smem:[#allocation0]]
  $region73: #{f_mlp_forward.1} parent=0
    _
  %s12 = ssub.s32 1, %s10
  %s13 = scalar_select 0, %s12, %s10
  loop: start=0, step=1, limit=4
  $region2: #{f_mlp_forward.1} parent=0 // loop_pre_header
    _
  $region3: #{f_mlp_forward.1} parent=0 // loop_header
    %s15 = sphi 0, %s19
    %p16 = scmp.ge.s32.totalorder %s15, 4
    %s25 = sphi 0, %s27
    %s28 = sphi 0, %s25
    %s29 = sphi 0, %s28
    %s45 = sphi 0, %s29
    %s49 = sphi 0, %s49
    %s51 = sphi 0, %s49
    %s52 = sphi 0, %s51
    %s66 = sphi 0, %s52
    %s70 = sphi 0, %s70
    %s72 = sphi 0, %s70
    %s73 = sphi 0, %s72
    %s87 = sphi 0, %s73
    %s91 = sphi 0, %s91
    %s93 = sphi 0, %s91
    %s94 = sphi 0, %s93
    %s108 = sphi 0, %s94
    %s112 = sphi 0, %s112
    %s114 = sphi 0, %s112
    %s115 = sphi 0, %s114
    %s129 = sphi 0, %s115
    %s133 = sphi 0, %s133
    %s135 = sphi 0, %s133
    %s136 = sphi 0, %s135
    %s150 = sphi 0, %s136
    %s156 = sphi 0, %s158
    %s159 = sphi 0, %s156
    %s160 = sphi 0, %s159
    %s176 = sphi 0, %s160
    %s182 = sphi 0, %s184
    %s185 = sphi 0, %s182
    %s186 = sphi 0, %s185
    %s202 = sphi 0, %s186
    %s208 = sphi 0, %s210
    %s211 = sphi 0, %s208
    %s212 = sphi 0, %s211
    %s228 = sphi 0, %s212
  $region4: #{f_mlp_forward.1} parent=0 // loop_header_branch
    %18 = sbr.rel (%p16) target = $region8
  $region5: #{f_mlp_forward.1} parent=0 // loop_body
    %s20 = ssub.s32 %s15, 1
    %s21 = ssub.s32 %s15, 2
    %s22 = sadd.s32 %s15, 1
    %s23 = ssub.s32 %s15, %s22
    %p24 = scmp.eq.s32.totalorder %s23, 0
    %s26 = sadd.s32 %s25, 1
    %s27 = scalar_select %p24, %s25, %s26
    %p30 = pneg %p24
    %p31 = scmp.eq.s32.totalorder %s15, 1
    %p32 = por %p30, %p31
    %p33 = scmp.ne.s32.totalorder %s25, %s28
    %p34 = scmp.eq.s32.totalorder %s15, 0
    %p35 = por %p33, %p34
    %p36 = scmp.ne.s32.totalorder %s25, %s28
    %p37 = scmp.eq.s32.totalorder %s20, 1
    %p38 = por %p36, %p37
    %p39 = scmp.ne.s32.totalorder %s28, %s29
    %p40 = scmp.eq.s32.totalorder %s20, 0
    %p41 = por %p39, %p40
    %p42 = scmp.ne.s32.totalorder %s28, %s29
    %p43 = scmp.eq.s32.totalorder %s21, 1
    %p44 = por %p42, %p43
    %p46 = scmp.ne.s32.totalorder %s29, %s45
    %p47 = scmp.eq.s32.totalorder %s21, 0
    %p48 = por %p46, %p47
    %s50 = sadd.s32 %s49, 1
    %p53 = scmp.eq.s32.totalorder %s15, 1
    %p54 = scmp.ne.s32.totalorder %s49, %s51
    %p55 = scmp.eq.s32.totalorder %s15, 0
    %p56 = por %p54, %p55
    %p57 = scmp.ne.s32.totalorder %s49, %s51
    %p58 = scmp.eq.s32.totalorder %s20, 1
    %p59 = por %p57, %p58
    %p60 = scmp.ne.s32.totalorder %s51, %s52
    %p61 = scmp.eq.s32.totalorder %s20, 0
    %p62 = por %p60, %p61
    %p63 = scmp.ne.s32.totalorder %s51, %s52
    %p64 = scmp.eq.s32.totalorder %s21, 1
    %p65 = por %p63, %p64
    %p67 = scmp.ne.s32.totalorder %s52, %s66
    %p68 = scmp.eq.s32.totalorder %s21, 0
    %p69 = por %p67, %p68
    %s71 = sadd.s32 %s70, 1
    %p74 = scmp.eq.s32.totalorder %s15, 1
    %p75 = scmp.ne.s32.totalorder %s70, %s72
    %p76 = scmp.eq.s32.totalorder %s15, 0
    %p77 = por %p75, %p76
    %p78 = scmp.ne.s32.totalorder %s70, %s72
    %p79 = scmp.eq.s32.totalorder %s20, 1
    %p80 = por %p78, %p79
    %p81 = scmp.ne.s32.totalorder %s72, %s73
    %p82 = scmp.eq.s32.totalorder %s20, 0
    %p83 = por %p81, %p82
    %p84 = scmp.ne.s32.totalorder %s72, %s73
    %p85 = scmp.eq.s32.totalorder %s21, 1
    %p86 = por %p84, %p85
    %p88 = scmp.ne.s32.totalorder %s73, %s87
    %p89 = scmp.eq.s32.totalorder %s21, 0
    %p90 = por %p88, %p89
    %s92 = sadd.s32 %s91, 1
    %p95 = scmp.eq.s32.totalorder %s15, 1
    %p96 = scmp.ne.s32.totalorder %s91, %s93
    %p97 = scmp.eq.s32.totalorder %s15, 0
    %p98 = por %p96, %p97
    %p99 = scmp.ne.s32.totalorder %s91, %s93
    %p100 = scmp.eq.s32.totalorder %s20, 1
    %p101 = por %p99, %p100
    %p102 = scmp.ne.s32.totalorder %s93, %s94
    %p103 = scmp.eq.s32.totalorder %s20, 0
    %p104 = por %p102, %p103
    %p105 = scmp.ne.s32.totalorder %s93, %s94
    %p106 = scmp.eq.s32.totalorder %s21, 1
    %p107 = por %p105, %p106
    %p109 = scmp.ne.s32.totalorder %s94, %s108
    %p110 = scmp.eq.s32.totalorder %s21, 0
    %p111 = por %p109, %p110
    %s113 = sadd.s32 %s112, 1
    %p116 = scmp.eq.s32.totalorder %s15, 1
    %p117 = scmp.ne.s32.totalorder %s112, %s114
    %p118 = scmp.eq.s32.totalorder %s15, 0
    %p119 = por %p117, %p118
    %p120 = scmp.ne.s32.totalorder %s112, %s114
    %p121 = scmp.eq.s32.totalorder %s20, 1
    %p122 = por %p120, %p121
    %p123 = scmp.ne.s32.totalorder %s114, %s115
    %p124 = scmp.eq.s32.totalorder %s20, 0
    %p125 = por %p123, %p124
    %p126 = scmp.ne.s32.totalorder %s114, %s115
    %p127 = scmp.eq.s32.totalorder %s21, 1
    %p128 = por %p126, %p127
    %p130 = scmp.ne.s32.totalorder %s115, %s129
    %p131 = scmp.eq.s32.totalorder %s21, 0
    %p132 = por %p130, %p131
    %s134 = sadd.s32 %s133, 1
    %p137 = scmp.eq.s32.totalorder %s15, 1
    %p138 = scmp.ne.s32.totalorder %s133, %s135
    %p139 = scmp.eq.s32.totalorder %s15, 0
    %p140 = por %p138, %p139
    %p141 = scmp.ne.s32.totalorder %s133, %s135
    %p142 = scmp.eq.s32.totalorder %s20, 1
    %p143 = por %p141, %p142
    %p144 = scmp.ne.s32.totalorder %s135, %s136
    %p145 = scmp.eq.s32.totalorder %s20, 0
    %p146 = por %p144, %p145
    %p147 = scmp.ne.s32.totalorder %s135, %s136
    %p148 = scmp.eq.s32.totalorder %s21, 1
    %p149 = por %p147, %p148
    %p151 = scmp.ne.s32.totalorder %s136, %s150
    %p152 = scmp.eq.s32.totalorder %s21, 0
    %p153 = por %p151, %p152
    %s154 = ssub.s32 %s15, %s22
    %p155 = scmp.eq.s32.totalorder %s154, 0
    %s157 = sadd.s32 %s156, 1
    %s158 = scalar_select %p155, %s156, %s157
    %p161 = pneg %p155
    %p162 = scmp.eq.s32.totalorder %s15, 1
    %p163 = por %p161, %p162
    %p164 = scmp.ne.s32.totalorder %s156, %s159
    %p165 = scmp.eq.s32.totalorder %s15, 0
    %p166 = por %p164, %p165
    %p167 = scmp.ne.s32.totalorder %s156, %s159
    %p168 = scmp.eq.s32.totalorder %s20, 1
    %p169 = por %p167, %p168
    %p170 = scmp.ne.s32.totalorder %s159, %s160
    %p171 = scmp.eq.s32.totalorder %s20, 0
    %p172 = por %p170, %p171
    %p173 = scmp.ne.s32.totalorder %s159, %s160
    %p174 = scmp.eq.s32.totalorder %s21, 1
    %p175 = por %p173, %p174
    %p177 = scmp.ne.s32.totalorder %s160, %s176
    %p178 = scmp.eq.s32.totalorder %s21, 0
    %p179 = por %p177, %p178
    %s180 = ssub.s32 %s15, %s22
    %p181 = scmp.eq.s32.totalorder %s180, 0
    %s183 = sadd.s32 %s182, 1
    %s184 = scalar_select %p181, %s182, %s183
    %p187 = pneg %p181
    %p188 = scmp.eq.s32.totalorder %s15, 1
    %p189 = por %p187, %p188
    %p190 = scmp.ne.s32.totalorder %s182, %s185
    %p191 = scmp.eq.s32.totalorder %s15, 0
    %p192 = por %p190, %p191
    %p193 = scmp.ne.s32.totalorder %s182, %s185
    %p194 = scmp.eq.s32.totalorder %s20, 1
    %p195 = por %p193, %p194
    %p196 = scmp.ne.s32.totalorder %s185, %s186
    %p197 = scmp.eq.s32.totalorder %s20, 0
    %p198 = por %p196, %p197
    %p199 = scmp.ne.s32.totalorder %s185, %s186
    %p200 = scmp.eq.s32.totalorder %s21, 1
    %p201 = por %p199, %p200
    %p203 = scmp.ne.s32.totalorder %s186, %s202
    %p204 = scmp.eq.s32.totalorder %s21, 0
    %p205 = por %p203, %p204
    %s206 = ssub.s32 %s15, %s22
    %p207 = scmp.eq.s32.totalorder %s206, 0
    %s209 = sadd.s32 %s208, 1
    %s210 = scalar_select %p207, %s208, %s209
    %p213 = pneg %p207
    %p214 = scmp.eq.s32.totalorder %s15, 1
    %p215 = por %p213, %p214
    %p216 = scmp.ne.s32.totalorder %s208, %s211
    %p217 = scmp.eq.s32.totalorder %s15, 0
    %p218 = por %p216, %p217
    %p219 = scmp.ne.s32.totalorder %s208, %s211
    %p220 = scmp.eq.s32.totalorder %s20, 1
    %p221 = por %p219, %p220
    %p222 = scmp.ne.s32.totalorder %s211, %s212
    %p223 = scmp.eq.s32.totalorder %s20, 0
    %p224 = por %p222, %p223
    %p225 = scmp.ne.s32.totalorder %s211, %s212
    %p226 = scmp.eq.s32.totalorder %s21, 1
    %p227 = por %p225, %p226
    %p229 = scmp.ne.s32.totalorder %s212, %s228
    %p230 = scmp.eq.s32.totalorder %s21, 0
    %p231 = por %p229, %p230
    %p232 = scmp.le.s32.totalorder 1, %s15
    %p233 = scmp.lt.s32.totalorder %s15, 3
    %p234 = pnand %p232, %p233
    %p235 = pneg %p234
    // Predicated region
    $region9: #{f_mlp_forward.1} parent=5 // pred_check
      _
    $region10: #{f_mlp_forward.1} parent=5 // pred_check_branch
      %237 = sbr.rel (%p234) target = $region12
    $region11: #{f_mlp_forward.1} parent=5 // pred_region
      %s238 = ssub.s32 %s15, 1
      // Predicated region
      $region13: #{f_mlp_forward.1} parent=11 // pred_check
        %p239 = pneg %p62
      $region14: #{f_mlp_forward.1} parent=11 // pred_check_branch
        %241 = sbr.rel (%p239) target = $region16
      $region15: #{f_mlp_forward.1} parent=11 // pred_region
        _
      $region16: #{f_mlp_forward.1} parent=11 // pred_fallthru
        _
      // Predicated region
      $region17: #{f_mlp_forward.1} parent=11 // pred_check
        %p242 = pneg %p83
      $region18: #{f_mlp_forward.1} parent=11 // pred_check_branch
        %244 = sbr.rel (%p242) target = $region20
      $region19: #{f_mlp_forward.1} parent=11 // pred_region
        _
      $region20: #{f_mlp_forward.1} parent=11 // pred_fallthru
        _
      // Predicated region
      $region21: #{f_mlp_forward.1} parent=11 // pred_check
        %p245 = pneg %p104
      $region22: #{f_mlp_forward.1} parent=11 // pred_check_branch
        %247 = sbr.rel (%p245) target = $region24
      $region23: #{f_mlp_forward.1} parent=11 // pred_region
        _
      $region24: #{f_mlp_forward.1} parent=11 // pred_fallthru
        _
      // Predicated region
      $region25: #{f_mlp_forward.1} parent=11 // pred_check
        %p248 = pneg %p125
      $region26: #{f_mlp_forward.1} parent=11 // pred_check_branch
        %250 = sbr.rel (%p248) target = $region28
      $region27: #{f_mlp_forward.1} parent=11 // pred_region
        _
      $region28: #{f_mlp_forward.1} parent=11 // pred_fallthru
        _
      // Predicated region
      $region29: #{f_mlp_forward.1} parent=11 // pred_check
        %p251 = pneg %p146
      $region30: #{f_mlp_forward.1} parent=11 // pred_check_branch
        %253 = sbr.rel (%p251) target = $region32
      $region31: #{f_mlp_forward.1} parent=11 // pred_region
        _
      $region32: #{f_mlp_forward.1} parent=11 // pred_fallthru
        _
    $region12: #{f_mlp_forward.1} parent=5 // pred_fallthru
      _
    %p254 = scmp.lt.s32.totalorder %s15, 2
    // Predicated region
    $region33: #{f_mlp_forward.1} parent=5 // pred_check
      %p255 = pneg %p254
    $region34: #{f_mlp_forward.1} parent=5 // pred_check_branch
      %257 = sbr.rel (%p255) target = $region36
    $region35: #{f_mlp_forward.1} parent=5 // pred_region
      // Predicated region
      $region37: #{f_mlp_forward.1} parent=35 // pred_check
        %p258 = pneg %p35
      $region38: #{f_mlp_forward.1} parent=35 // pred_check_branch
        %260 = sbr.rel (%p258) target = $region40
      $region39: #{f_mlp_forward.1} parent=35 // pred_region
        %s261 = smul.u32 16, %s15
        %p262 = scmp.lt.s32.totalorder %s261, 31
        %s263 = scalar_select %p262, %s261, 31
        %s264 = smul.addr %s263, 8
        %s265 = scalar_lea.vmem %s0, %s264
        %s266 = smul.u32 16, %s15
      $region40: #{f_mlp_forward.1} parent=35 // pred_fallthru
        _
    $region36: #{f_mlp_forward.1} parent=5 // pred_fallthru
      _
    %p267 = scmp.le.s32.totalorder 1, %s15
    %p268 = scmp.lt.s32.totalorder %s15, 3
    %p269 = pnand %p267, %p268
    %p270 = pneg %p269
    // Predicated region
    $region41: #{f_mlp_forward.1} parent=5 // pred_check
      _
    $region42: #{f_mlp_forward.1} parent=5 // pred_check_branch
      %272 = sbr.rel (%p269) target = $region44
    $region43: #{f_mlp_forward.1} parent=5 // pred_region
      %s273 = ssub.s32 %s15, 1
      %s274 = smul.u32 16, %s20
      %p275 = scmp.lt.s32.totalorder %s274, 31
      %s276 = scalar_select %p275, %s274, 31
      %s277 = smul.addr %s276, 8
      %s278 = scalar_lea.vmem %s0, %s277
      %p279 = pneg %p41
      %p280 = pneg %p38
      %p281 = pneg %p62
      %p282 = pneg %p59
      %p283 = pneg %p83
      %p284 = pneg %p80
      %p285 = pneg %p104
      %p286 = pneg %p101
      %p287 = pneg %p125
      %p288 = pneg %p122
      %p289 = pneg %p146
      %p290 = pneg %p143
      %p291 = pneg %p172
      %p292 = pneg %p169
      %s293 = smul.u32 16, %s20
      %p294 = scmp.lt.s32.totalorder %s293, 31
      %s295 = scalar_select %p294, %s293, 31
      %s296 = smul.addr %s295, 8
      %s297 = scalar_lea.vmem %s6, %s296
      %p298 = pneg %p198
      %p299 = pneg %p195
      %s300 = smul.u32 16, %s20
      %p301 = scmp.lt.s32.totalorder %s300, 31
      %s302 = scalar_select %p301, %s300, 31
      %s303 = smul.addr %s302, 8
      %s304 = scalar_lea.vmem %s7, %s303
      %p305 = pneg %p224
      %p306 = pneg %p221
      %s307 = smul.u32 16, %s20
      %p308 = scmp.lt.s32.totalorder %s307, 31
      %s309 = scalar_select %p308, %s307, 31
      %s310 = smul.addr %s309, 8
      %s311 = scalar_lea.vmem %s8, %s310
      %s312 = smul.u32 16, %s20
      %p313 = scmp.lt.s32.totalorder %s312, 31
      %s314 = scalar_select %p313, %s312, 31
      %s315 = smul.addr %s314, 8
      %s316 = scalar_lea.vmem %s0, %s315
      %s317 = smul.u32 16, %s20
      %s318 = smul.u32 16, %s20
      %p319 = scmp.lt.s32.totalorder %s318, 31
      %s320 = scalar_select %p319, %s318, 31
      %s321 = smul.addr %s320, 8
      %s322 = scalar_lea.vmem %s6, %s321
      %s323 = smul.u32 16, %s20
      %s324 = smul.u32 16, %s20
      %p325 = scmp.lt.s32.totalorder %s324, 31
      %s326 = scalar_select %p325, %s324, 31
      %s327 = smul.addr %s326, 8
      %s328 = scalar_lea.vmem %s7, %s327
      %s329 = smul.u32 16, %s20
      %s330 = smul.u32 16, %s20
      %p331 = scmp.lt.s32.totalorder %s330, 31
      %s332 = scalar_select %p331, %s330, 31
      %s333 = smul.addr %s332, 8
      %s334 = scalar_lea.vmem %s8, %s333
      %s335 = smul.u32 16, %s20
      %v337 = vld [vmem:[%s316] sm:$0xff]
      %v338 = vld [vmem:[%s316 + $0x8] sm:$0xff]
      %v339 = vld [vmem:[%s316 + $0x10] sm:$0xff]
      %v340 = vld [vmem:[%s316 + $0x18] sm:$0xff]
      %v341 = vld [vmem:[%s316 + $0x20] sm:$0xff]
      %v342 = vld [vmem:[%s316 + $0x28] sm:$0xff]
      %v343 = vld [vmem:[%s316 + $0x30] sm:$0xff]
      %v344 = vld [vmem:[%s316 + $0x38] sm:$0xff]
      %v345 = vld [vmem:[%s316 + $0x40] sm:$0xff]
      %v346 = vld [vmem:[%s316 + $0x48] sm:$0xff]
      %v347 = vld [vmem:[%s316 + $0x50] sm:$0xff]
      %v348 = vld [vmem:[%s316 + $0x58] sm:$0xff]
      %v349 = vld [vmem:[%s316 + $0x60] sm:$0xff]
      %v350 = vld [vmem:[%s316 + $0x68] sm:$0xff]
      %v351 = vld [vmem:[%s316 + $0x70] sm:$0xff]
      %v352 = vld [vmem:[%s316 + $0x78] sm:$0xff]
      %v353 = vpack.c.bf16 %v338, %v337
      %v354 = vpack.c.bf16 %v340, %v339
      %v355 = vpack.c.bf16 %v342, %v341
      %v356 = vpack.c.bf16 %v344, %v343
      %v357 = vpack.c.bf16 %v346, %v345
      %v358 = vpack.c.bf16 %v348, %v347
      %v359 = vpack.c.bf16 %v350, %v349
      %v360 = vpack.c.bf16 %v352, %v351
      %v361 = vld [vmem:[%s1] sm:$0xf]
      %v362 = vld [vmem:[%s1 + $0x4] sm:$0xf]
      %v363 = vld [vmem:[%s1 + $0x8] sm:$0xf]
      %v364 = vld [vmem:[%s1 + $0xc] sm:$0xf]
      %v365 = vld [vmem:[%s2] sm:$0x1]
      %v367 = vlaneseq
      %v368 = vshrl.u32 %v367, 7
      %v369 = vsub.s32 0, %v368
      %v370 = vrot.slane %v365, %v369
      %v376 = vunpack.c.l.b16 %v361
      %v377 = vunpack.c.l.b16 %v362
      %v378 = vunpack.c.l.b16 %v363
      %v379 = vunpack.c.l.b16 %v364
      %v380 = vpack.c.b16 %v377, %v376
      %v381 = vpack.c.b16 %v379, %v378
      %vm384 = vcmask 261120
      %v386 = vsel %vm384, %v353, 0
      %v389 = vsel %vm384, %v354, 0
      %v392 = vsel %vm384, %v355, 0
      %v395 = vsel %vm384, %v356, 0
      %v398 = vsel %vm384, %v357, 0
      %v401 = vsel %vm384, %v358, 0
      %v404 = vsel %vm384, %v359, 0
      %v407 = vsel %vm384, %v360, 0
      %409 = vmatprep.subr.bf16.mxu0 0
      %410 = vmatpush1.bf16.msra.mxu0 0
      %411 = vmatprep.subr.bf16.mxu0 0
      %412 = vmatpush1.bf16.msra.mxu0 0
      %413 = vmatprep.subr.bf16.mxu0 0
      %414 = vmatpush1.bf16.msra.mxu0 0
      %415 = vmatprep.subr.bf16.mxu0 0
      %416 = vmatpush1.bf16.msra.mxu0 0
      %417 = vmatprep.subr.bf16.mxu0 0
      %418 = vmatpush1.bf16.msra.mxu0 0
      %419 = vmatprep.subr.bf16.mxu0 0
      %420 = vmatpush1.bf16.msra.mxu0 0
      %421 = vmatprep.subr.bf16.mxu0 0
      %422 = vmatpush1.bf16.msra.mxu0 %v381
      %423 = vmatprep.subr.bf16.mxu0 0
      %424 = vmatpush1.bf16.msra.mxu0 %v380
      %425 = vmatprep.subr.bf16.mxu0 0
      %426 = vmatpush2.bf16.msra.mxu0 0
      %427 = vmatprep.subr.bf16.mxu0 0
      %428 = vmatpush2.bf16.msra.mxu0 0
      %429 = vmatprep.subr.bf16.mxu0 0
      %430 = vmatpush2.bf16.msra.mxu0 0
      %431 = vmatprep.subr.bf16.mxu0 0
      %432 = vmatpush2.bf16.msra.mxu0 0
      %433 = vmatprep.subr.bf16.mxu0 0
      %434 = vmatpush2.bf16.msra.mxu0 0
      %435 = vmatprep.subr.bf16.mxu0 0
      %436 = vmatpush2.bf16.msra.mxu0 0
      %437 = vmatprep.subr.bf16.mxu0 0
      %438 = vmatpush2.bf16.msra.mxu0 0
      %439 = vmatprep.subr.bf16.mxu0 0
      %440 = vmatpush2.bf16.msra.mxu0 0
      %441 = vmatprep.mubr.bf16.mxu0 0
      %442 = vmatmul.mubr.bf16.gmra.mxu0 %v386
      %v443 = vpop.f32.mrf.mxu0
      %v444 = vadd.f32 %v370, %v443
      %v445 = vpop.f32.mrf.mxu0
      %v446 = vpop.f32.mrf.mxu0
      %v447 = vadd.f32 %v370, %v446
      %v448 = vpop.f32.mrf.mxu0
      %449 = vmatprep.mubr.bf16.mxu0 0
      %450 = vmatmul.mubr.bf16.gmra.mxu0 %v389
      %v451 = vpop.f32.mrf.mxu0
      %v452 = vadd.f32 %v370, %v451
      %v453 = vpop.f32.mrf.mxu0
      %v454 = vpop.f32.mrf.mxu0
      %v455 = vadd.f32 %v370, %v454
      %v456 = vpop.f32.mrf.mxu0
      %457 = vmatprep.mubr.bf16.mxu0 0
      %458 = vmatmul.mubr.bf16.gmra.mxu0 %v392
      %v459 = vpop.f32.mrf.mxu0
      %v460 = vadd.f32 %v370, %v459
      %v461 = vpop.f32.mrf.mxu0
      %v462 = vpop.f32.mrf.mxu0
      %v463 = vadd.f32 %v370, %v462
      %v464 = vpop.f32.mrf.mxu0
      %465 = vmatprep.mubr.bf16.mxu0 0
      %466 = vmatmul.mubr.bf16.gmra.mxu0 %v395
      %v467 = vpop.f32.mrf.mxu0
      %v468 = vadd.f32 %v370, %v467
      %v469 = vpop.f32.mrf.mxu0
      %v470 = vpop.f32.mrf.mxu0
      %v471 = vadd.f32 %v370, %v470
      %v472 = vpop.f32.mrf.mxu0
      %473 = vmatprep.mubr.bf16.mxu0 0
      %474 = vmatmul.mubr.bf16.gmra.mxu0 %v398
      %v475 = vpop.f32.mrf.mxu0
      %v476 = vadd.f32 %v370, %v475
      %v477 = vpop.f32.mrf.mxu0
      %v478 = vpop.f32.mrf.mxu0
      %v479 = vadd.f32 %v370, %v478
      %v480 = vpop.f32.mrf.mxu0
      %481 = vmatprep.mubr.bf16.mxu0 0
      %482 = vmatmul.mubr.bf16.gmra.mxu0 %v401
      %v483 = vpop.f32.mrf.mxu0
      %v484 = vadd.f32 %v370, %v483
      %v485 = vpop.f32.mrf.mxu0
      %v486 = vpop.f32.mrf.mxu0
      %v487 = vadd.f32 %v370, %v486
      %v488 = vpop.f32.mrf.mxu0
      %489 = vmatprep.mubr.bf16.mxu0 0
      %490 = vmatmul.mubr.bf16.gmra.mxu0 %v404
      %v491 = vpop.f32.mrf.mxu0
      %v492 = vadd.f32 %v370, %v491
      %v493 = vpop.f32.mrf.mxu0
      %v494 = vpop.f32.mrf.mxu0
      %v495 = vadd.f32 %v370, %v494
      %v496 = vpop.f32.mrf.mxu0
      %497 = vmatprep.mubr.bf16.mxu0 0
      %498 = vmatmul.mubr.bf16.gmra.mxu0 %v407
      %v499 = vpop.f32.mrf.mxu0
      %v500 = vadd.f32 %v370, %v499
      %v501 = vpop.f32.mrf.mxu0
      %v502 = vpop.f32.mrf.mxu0
      %v503 = vadd.f32 %v370, %v502
      %v504 = vpop.f32.mrf.mxu0
      %505 = vdwg.mxu0
      %vm506 = vcmask 130048
      %v507 = vsel %vm506, %v444, -inf
      %508 = vmax.xlane.f32.xlu0 %v507
      %v509 = vpop.xlane.xlu0 %508
      %v510 = vsel %vm506, %v447, -inf
      %511 = vmax.xlane.f32.xlu0 %v510
      %v512 = vpop.xlane.xlu0 %511
      %v513 = vsel %vm506, %v452, -inf
      %514 = vmax.xlane.f32.xlu0 %v513
      %v515 = vpop.xlane.xlu0 %514
      %v516 = vsel %vm506, %v455, -inf
      %517 = vmax.xlane.f32.xlu0 %v516
      %v518 = vpop.xlane.xlu0 %517
      %v519 = vsel %vm506, %v460, -inf
      %520 = vmax.xlane.f32.xlu0 %v519
      %v521 = vpop.xlane.xlu0 %520
      %v522 = vsel %vm506, %v463, -inf
      %523 = vmax.xlane.f32.xlu0 %v522
      %v524 = vpop.xlane.xlu0 %523
      %v525 = vsel %vm506, %v468, -inf
      %526 = vmax.xlane.f32.xlu0 %v525
      %v527 = vpop.xlane.xlu0 %526
      %v528 = vsel %vm506, %v471, -inf
      %529 = vmax.xlane.f32.xlu0 %v528
      %v530 = vpop.xlane.xlu0 %529
      %v531 = vsel %vm506, %v476, -inf
      %532 = vmax.xlane.f32.xlu0 %v531
      %v533 = vpop.xlane.xlu0 %532
      %v534 = vsel %vm506, %v479, -inf
      %535 = vmax.xlane.f32.xlu0 %v534
      %v536 = vpop.xlane.xlu0 %535
      %v537 = vsel %vm506, %v484, -inf
      %538 = vmax.xlane.f32.xlu0 %v537
      %v539 = vpop.xlane.xlu0 %538
      %v540 = vsel %vm506, %v487, -inf
      %541 = vmax.xlane.f32.xlu0 %v540
      %v542 = vpop.xlane.xlu0 %541
      %v543 = vsel %vm506, %v492, -inf
      %544 = vmax.xlane.f32.xlu0 %v543
      %v545 = vpop.xlane.xlu0 %544
      %v546 = vsel %vm506, %v495, -inf
      %547 = vmax.xlane.f32.xlu0 %v546
      %v548 = vpop.xlane.xlu0 %547
      %v549 = vsel %vm506, %v500, -inf
      %550 = vmax.xlane.f32.xlu0 %v549
      %v551 = vpop.xlane.xlu0 %550
      %v552 = vsel %vm506, %v503, -inf
      %553 = vmax.xlane.f32.xlu0 %v552
      %v554 = vpop.xlane.xlu0 %553
      %v555 = vsub.f32 %v444, %v509
      %v556 = vsub.f32 %v447, %v512
      %v557 = vsub.f32 %v452, %v515
      %v558 = vsub.f32 %v455, %v518
      %v559 = vsub.f32 %v460, %v521
      %v560 = vsub.f32 %v463, %v524
      %v561 = vsub.f32 %v468, %v527
      %v562 = vsub.f32 %v471, %v530
      %v563 = vsub.f32 %v476, %v533
      %v564 = vsub.f32 %v479, %v536
      %v565 = vsub.f32 %v484, %v539
      %v566 = vsub.f32 %v487, %v542
      %v567 = vsub.f32 %v492, %v545
      %v568 = vsub.f32 %v495, %v548
      %v569 = vsub.f32 %v500, %v551
      %v570 = vsub.f32 %v503, %v554
      %v571 = vmul.f32 %v555, 1.442695
      %v572 = vpow.pop %v571
      %v573 = vmul.f32 %v556, 1.442695
      %v574 = vpow.pop %v573
      %v575 = vmul.f32 %v557, 1.442695
      %v576 = vpow.pop %v575
      %v577 = vmul.f32 %v558, 1.442695
      %v578 = vpow.pop %v577
      %v579 = vmul.f32 %v559, 1.442695
      %v580 = vpow.pop %v579
      %v581 = vmul.f32 %v560, 1.442695
      %v582 = vpow.pop %v581
      %v583 = vmul.f32 %v561, 1.442695
      %v584 = vpow.pop %v583
      %v585 = vmul.f32 %v562, 1.442695
      %v586 = vpow.pop %v585
      %v587 = vmul.f32 %v563, 1.442695
      %v588 = vpow.pop %v587
      %v589 = vmul.f32 %v564, 1.442695
      %v590 = vpow.pop %v589
      %v591 = vmul.f32 %v565, 1.442695
      %v592 = vpow.pop %v591
      %v593 = vmul.f32 %v566, 1.442695
      %v594 = vpow.pop %v593
      %v595 = vmul.f32 %v567, 1.442695
      %v596 = vpow.pop %v595
      %v597 = vmul.f32 %v568, 1.442695
      %v598 = vpow.pop %v597
      %v599 = vmul.f32 %v569, 1.442695
      %v600 = vpow.pop %v599
      %v601 = vmul.f32 %v570, 1.442695
      %v602 = vpow.pop %v601
      %v603 = vsel %vm506, %v572, 0.0
      %604 = vadd.xlane.f32.xlu0 %v603
      %v605 = vpop.xlane.xlu0 %604
      %v606 = vsel %vm506, %v574, 0.0
      %607 = vadd.xlane.f32.xlu0 %v606
      %v608 = vpop.xlane.xlu0 %607
      %v609 = vsel %vm506, %v576, 0.0
      %610 = vadd.xlane.f32.xlu0 %v609
      %v611 = vpop.xlane.xlu0 %610
      %v612 = vsel %vm506, %v578, 0.0
      %613 = vadd.xlane.f32.xlu0 %v612
      %v614 = vpop.xlane.xlu0 %613
      %v615 = vsel %vm506, %v580, 0.0
      %616 = vadd.xlane.f32.xlu0 %v615
      %v617 = vpop.xlane.xlu0 %616
      %v618 = vsel %vm506, %v582, 0.0
      %619 = vadd.xlane.f32.xlu0 %v618
      %v620 = vpop.xlane.xlu0 %619
      %v621 = vsel %vm506, %v584, 0.0
      %622 = vadd.xlane.f32.xlu0 %v621
      %v623 = vpop.xlane.xlu0 %622
      %v624 = vsel %vm506, %v586, 0.0
      %625 = vadd.xlane.f32.xlu0 %v624
      %v626 = vpop.xlane.xlu0 %625
      %v627 = vsel %vm506, %v588, 0.0
      %628 = vadd.xlane.f32.xlu0 %v627
      %v629 = vpop.xlane.xlu0 %628
      %v630 = vsel %vm506, %v590, 0.0
      %631 = vadd.xlane.f32.xlu0 %v630
      %v632 = vpop.xlane.xlu0 %631
      %v633 = vsel %vm506, %v592, 0.0
      %634 = vadd.xlane.f32.xlu0 %v633
      %v635 = vpop.xlane.xlu0 %634
      %v636 = vsel %vm506, %v594, 0.0
      %637 = vadd.xlane.f32.xlu0 %v636
      %v638 = vpop.xlane.xlu0 %637
      %v639 = vsel %vm506, %v596, 0.0
      %640 = vadd.xlane.f32.xlu0 %v639
      %v641 = vpop.xlane.xlu0 %640
      %v642 = vsel %vm506, %v598, 0.0
      %643 = vadd.xlane.f32.xlu0 %v642
      %v644 = vpop.xlane.xlu0 %643
      %v645 = vsel %vm506, %v600, 0.0
      %646 = vadd.xlane.f32.xlu0 %v645
      %v647 = vpop.xlane.xlu0 %646
      %v648 = vsel %vm506, %v602, 0.0
      %649 = vadd.xlane.f32.xlu0 %v648
      %v650 = vpop.xlane.xlu0 %649
      %v651 = vlog2.pop %v605
      %v652 = vmul.f32 %v651, 0.6931472
      %v653 = vlog2.pop %v608
      %v654 = vmul.f32 %v653, 0.6931472
      %v655 = vlog2.pop %v611
      %v656 = vmul.f32 %v655, 0.6931472
      %v657 = vlog2.pop %v614
      %v658 = vmul.f32 %v657, 0.6931472
      %v659 = vlog2.pop %v617
      %v660 = vmul.f32 %v659, 0.6931472
      %v661 = vlog2.pop %v620
      %v662 = vmul.f32 %v661, 0.6931472
      %v663 = vlog2.pop %v623
      %v664 = vmul.f32 %v663, 0.6931472
      %v665 = vlog2.pop %v626
      %v666 = vmul.f32 %v665, 0.6931472
      %v667 = vlog2.pop %v629
      %v668 = vmul.f32 %v667, 0.6931472
      %v669 = vlog2.pop %v632
      %v670 = vmul.f32 %v669, 0.6931472
      %v671 = vlog2.pop %v635
      %v672 = vmul.f32 %v671, 0.6931472
      %v673 = vlog2.pop %v638
      %v674 = vmul.f32 %v673, 0.6931472
      %v675 = vlog2.pop %v641
      %v676 = vmul.f32 %v675, 0.6931472
      %v677 = vlog2.pop %v644
      %v678 = vmul.f32 %v677, 0.6931472
      %v679 = vlog2.pop %v647
      %v680 = vmul.f32 %v679, 0.6931472
      %v681 = vlog2.pop %v650
      %v682 = vmul.f32 %v681, 0.6931472
      %v683 = vsub.f32 %v555, %v652
      %v684 = vsub.f32 %v556, %v654
      %v685 = vsub.f32 %v557, %v656
      %v686 = vsub.f32 %v558, %v658
      %v687 = vsub.f32 %v559, %v660
      %v688 = vsub.f32 %v560, %v662
      %v689 = vsub.f32 %v561, %v664
      %v690 = vsub.f32 %v562, %v666
      %v691 = vsub.f32 %v563, %v668
      %v692 = vsub.f32 %v564, %v670
      %v693 = vsub.f32 %v565, %v672
      %v694 = vsub.f32 %v566, %v674
      %v695 = vsub.f32 %v567, %v676
      %v696 = vsub.f32 %v568, %v678
      %v697 = vsub.f32 %v569, %v680
      %v698 = vsub.f32 %v570, %v682
      %699 = vst.msk [vmem:[%s322] sm:$0xff] %vm506, %v683
      %700 = vst.msk [vmem:[%s322 + $0x8] sm:$0xff] %vm506, %v684
      %701 = vst.msk [vmem:[%s322 + $0x10] sm:$0xff] %vm506, %v685
      %702 = vst.msk [vmem:[%s322 + $0x18] sm:$0xff] %vm506, %v686
      %703 = vst.msk [vmem:[%s322 + $0x20] sm:$0xff] %vm506, %v687
      %704 = vst.msk [vmem:[%s322 + $0x28] sm:$0xff] %vm506, %v688
      %705 = vst.msk [vmem:[%s322 + $0x30] sm:$0xff] %vm506, %v689
      %706 = vst.msk [vmem:[%s322 + $0x38] sm:$0xff] %vm506, %v690
      %707 = vst.msk [vmem:[%s322 + $0x40] sm:$0xff] %vm506, %v691
      %708 = vst.msk [vmem:[%s322 + $0x48] sm:$0xff] %vm506, %v692
      %709 = vst.msk [vmem:[%s322 + $0x50] sm:$0xff] %vm506, %v693
      %710 = vst.msk [vmem:[%s322 + $0x58] sm:$0xff] %vm506, %v694
      %711 = vst.msk [vmem:[%s322 + $0x60] sm:$0xff] %vm506, %v695
      %712 = vst.msk [vmem:[%s322 + $0x68] sm:$0xff] %vm506, %v696
      %713 = vst.msk [vmem:[%s322 + $0x70] sm:$0xff] %vm506, %v697
      %714 = vst.msk [vmem:[%s322 + $0x78] sm:$0xff] %vm506, %v698
      %v715 = vld [vmem:[%s3] sm:$0xff]
      %v716 = vld [vmem:[%s3 + $0x8] sm:$0xff]
      %v717 = vld [vmem:[%s4] sm:$0x1]
      %v719 = vlaneseq
      %v720 = vshrl.u32 %v719, 7
      %v721 = vsub.s32 0, %v720
      %v722 = vrot.slane %v717, %v721
      %v725 = vsel %vm506, %v683, 0
      %v728 = vsel %vm506, %v684, 0
      %v731 = vsel %vm506, %v685, 0
      %v734 = vsel %vm506, %v686, 0
      %v737 = vsel %vm506, %v687, 0
      %v740 = vsel %vm506, %v688, 0
      %v743 = vsel %vm506, %v689, 0
      %v746 = vsel %vm506, %v690, 0
      %v749 = vsel %vm506, %v691, 0
      %v752 = vsel %vm506, %v692, 0
      %v755 = vsel %vm506, %v693, 0
      %v758 = vsel %vm506, %v694, 0
      %v761 = vsel %vm506, %v695, 0
      %v764 = vsel %vm506, %v696, 0
      %v767 = vsel %vm506, %v697, 0
      %v770 = vsel %vm506, %v698, 0
      %772 = vmatprep.subr.mxu0 0.0
      %773 = vmatpush1.msra.mxu0 0.0
      %774 = vmatprep.subr.mxu0 0.0
      %775 = vmatpush1.msra.mxu0 0.0
      %776 = vmatprep.subr.mxu0 0.0
      %777 = vmatpush1.msra.mxu0 0.0
      %778 = vmatprep.subr.mxu0 0.0
      %779 = vmatpush1.msra.mxu0 0.0
      %780 = vmatprep.subr.mxu0 0.0
      %781 = vmatpush1.msra.mxu0 0.0
      %782 = vmatprep.subr.mxu0 0.0
      %783 = vmatpush1.msra.mxu0 0.0
      %784 = vmatprep.subr.mxu0 0.0
      %785 = vmatpush1.msra.mxu0 0.0
      %786 = vmatprep.subr.mxu0 0.0
      %787 = vmatpush1.msra.mxu0 0.0
      %788 = vmatprep.subr.mxu0 0.0
      %789 = vmatpush1.msra.mxu0 0.0
      %790 = vmatprep.subr.mxu0 0.0
      %791 = vmatpush1.msra.mxu0 0.0
      %792 = vmatprep.subr.mxu0 0.0
      %793 = vmatpush1.msra.mxu0 0.0
      %794 = vmatprep.subr.mxu0 0.0
      %795 = vmatpush1.msra.mxu0 0.0
      %796 = vmatprep.subr.mxu0 0.0
      %797 = vmatpush1.msra.mxu0 0.0
      %798 = vmatprep.subr.mxu0 0.0
      %799 = vmatpush1.msra.mxu0 0.0
      %800 = vmatprep.subr.mxu0 0.0
      %801 = vmatpush1.msra.mxu0 %v716
      %802 = vmatprep.subr.mxu0 0.0
      %803 = vmatpush1.msra.mxu0 %v715
      %804 = vmatprep.subr.mxu0 0.0
      %805 = vmatpush2.msra.mxu0 0.0
      %806 = vmatprep.subr.mxu0 0.0
      %807 = vmatpush2.msra.mxu0 0.0
      %808 = vmatprep.subr.mxu0 0.0
      %809 = vmatpush2.msra.mxu0 0.0
      %810 = vmatprep.subr.mxu0 0.0
      %811 = vmatpush2.msra.mxu0 0.0
      %812 = vmatprep.subr.mxu0 0.0
      %813 = vmatpush2.msra.mxu0 0.0
      %814 = vmatprep.subr.mxu0 0.0
      %815 = vmatpush2.msra.mxu0 0.0
      %816 = vmatprep.subr.mxu0 0.0
      %817 = vmatpush2.msra.mxu0 0.0
      %818 = vmatprep.subr.mxu0 0.0
      %819 = vmatpush2.msra.mxu0 0.0
      %820 = vmatprep.subr.mxu0 0.0
      %821 = vmatpush2.msra.mxu0 0.0
      %822 = vmatprep.subr.mxu0 0.0
      %823 = vmatpush2.msra.mxu0 0.0
      %824 = vmatprep.subr.mxu0 0.0
      %825 = vmatpush2.msra.mxu0 0.0
      %826 = vmatprep.subr.mxu0 0.0
      %827 = vmatpush2.msra.mxu0 0.0
      %828 = vmatprep.subr.mxu0 0.0
      %829 = vmatpush2.msra.mxu0 0.0
      %830 = vmatprep.subr.mxu0 0.0
      %831 = vmatpush2.msra.mxu0 0.0
      %832 = vmatprep.subr.mxu0 0.0
      %833 = vmatpush2.msra.mxu0 0.0
      %834 = vmatprep.subr.mxu0 0.0
      %835 = vmatpush2.msra.mxu0 0.0
      %836 = vmatprep.mubr.f32.mxu0 0.0
      %837 = vmatmul.mubr.f32.gmra.mxu0 %v725
      %v838 = vpop.f32.mrf.mxu0
      %v839 = vadd.f32 %v722, %v838
      %v840 = vpop.f32.mrf.mxu0
      %841 = vmatprep.mubr.f32.mxu0 0.0
      %842 = vmatmul.mubr.f32.gmra.mxu0 %v728
      %v843 = vpop.f32.mrf.mxu0
      %v844 = vadd.f32 %v722, %v843
      %v845 = vpop.f32.mrf.mxu0
      %846 = vmatprep.mubr.f32.mxu0 0.0
      %847 = vmatmul.mubr.f32.gmra.mxu0 %v731
      %v848 = vpop.f32.mrf.mxu0
      %v849 = vadd.f32 %v722, %v848
      %v850 = vpop.f32.mrf.mxu0
      %851 = vmatprep.mubr.f32.mxu0 0.0
      %852 = vmatmul.mubr.f32.gmra.mxu0 %v734
      %v853 = vpop.f32.mrf.mxu0
      %v854 = vadd.f32 %v722, %v853
      %v855 = vpop.f32.mrf.mxu0
      %856 = vmatprep.mubr.f32.mxu0 0.0
      %857 = vmatmul.mubr.f32.gmra.mxu0 %v737
      %v858 = vpop.f32.mrf.mxu0
      %v859 = vadd.f32 %v722, %v858
      %v860 = vpop.f32.mrf.mxu0
      %861 = vmatprep.mubr.f32.mxu0 0.0
      %862 = vmatmul.mubr.f32.gmra.mxu0 %v740
      %v863 = vpop.f32.mrf.mxu0
      %v864 = vadd.f32 %v722, %v863
      %v865 = vpop.f32.mrf.mxu0
      %866 = vmatprep.mubr.f32.mxu0 0.0
      %867 = vmatmul.mubr.f32.gmra.mxu0 %v743
      %v868 = vpop.f32.mrf.mxu0
      %v869 = vadd.f32 %v722, %v868
      %v870 = vpop.f32.mrf.mxu0
      %871 = vmatprep.mubr.f32.mxu0 0.0
      %872 = vmatmul.mubr.f32.gmra.mxu0 %v746
      %v873 = vpop.f32.mrf.mxu0
      %v874 = vadd.f32 %v722, %v873
      %v875 = vpop.f32.mrf.mxu0
      %876 = vmatprep.mubr.f32.mxu0 0.0
      %877 = vmatmul.mubr.f32.gmra.mxu0 %v749
      %v878 = vpop.f32.mrf.mxu0
      %v879 = vadd.f32 %v722, %v878
      %v880 = vpop.f32.mrf.mxu0
      %881 = vmatprep.mubr.f32.mxu0 0.0
      %882 = vmatmul.mubr.f32.gmra.mxu0 %v752
      %v883 = vpop.f32.mrf.mxu0
      %v884 = vadd.f32 %v722, %v883
      %v885 = vpop.f32.mrf.mxu0
      %886 = vmatprep.mubr.f32.mxu0 0.0
      %887 = vmatmul.mubr.f32.gmra.mxu0 %v755
      %v888 = vpop.f32.mrf.mxu0
      %v889 = vadd.f32 %v722, %v888
      %v890 = vpop.f32.mrf.mxu0
      %891 = vmatprep.mubr.f32.mxu0 0.0
      %892 = vmatmul.mubr.f32.gmra.mxu0 %v758
      %v893 = vpop.f32.mrf.mxu0
      %v894 = vadd.f32 %v722, %v893
      %v895 = vpop.f32.mrf.mxu0
      %896 = vmatprep.mubr.f32.mxu0 0.0
      %897 = vmatmul.mubr.f32.gmra.mxu0 %v761
      %v898 = vpop.f32.mrf.mxu0
      %v899 = vadd.f32 %v722, %v898
      %v900 = vpop.f32.mrf.mxu0
      %901 = vmatprep.mubr.f32.mxu0 0.0
      %902 = vmatmul.mubr.f32.gmra.mxu0 %v764
      %v903 = vpop.f32.mrf.mxu0
      %v904 = vadd.f32 %v722, %v903
      %v905 = vpop.f32.mrf.mxu0
      %906 = vmatprep.mubr.f32.mxu0 0.0
      %907 = vmatmul.mubr.f32.gmra.mxu0 %v767
      %v908 = vpop.f32.mrf.mxu0
      %v909 = vadd.f32 %v722, %v908
      %v910 = vpop.f32.mrf.mxu0
      %911 = vmatprep.mubr.f32.mxu0 0.0
      %912 = vmatmul.mubr.f32.gmra.mxu0 %v770
      %v913 = vpop.f32.mrf.mxu0
      %v914 = vadd.f32 %v722, %v913
      %v915 = vpop.f32.mrf.mxu0
      %916 = vdwg.mxu0
      %vm917 = vcmask 15360
      %918 = vst.msk [vmem:[%s328] sm:$0xff] %vm917, %v839
      %919 = vst.msk [vmem:[%s328 + $0x8] sm:$0xff] %vm917, %v844
      %920 = vst.msk [vmem:[%s328 + $0x10] sm:$0xff] %vm917, %v849
      %921 = vst.msk [vmem:[%s328 + $0x18] sm:$0xff] %vm917, %v854
      %922 = vst.msk [vmem:[%s328 + $0x20] sm:$0xff] %vm917, %v859
      %923 = vst.msk [vmem:[%s328 + $0x28] sm:$0xff] %vm917, %v864
      %924 = vst.msk [vmem:[%s328 + $0x30] sm:$0xff] %vm917, %v869
      %925 = vst.msk [vmem:[%s328 + $0x38] sm:$0xff] %vm917, %v874
      %926 = vst.msk [vmem:[%s328 + $0x40] sm:$0xff] %vm917, %v879
      %927 = vst.msk [vmem:[%s328 + $0x48] sm:$0xff] %vm917, %v884
      %928 = vst.msk [vmem:[%s328 + $0x50] sm:$0xff] %vm917, %v889
      %929 = vst.msk [vmem:[%s328 + $0x58] sm:$0xff] %vm917, %v894
      %930 = vst.msk [vmem:[%s328 + $0x60] sm:$0xff] %vm917, %v899
      %931 = vst.msk [vmem:[%s328 + $0x68] sm:$0xff] %vm917, %v904
      %932 = vst.msk [vmem:[%s328 + $0x70] sm:$0xff] %vm917, %v909
      %933 = vst.msk [vmem:[%s328 + $0x78] sm:$0xff] %vm917, %v914
      %v934 = vld [vmem:[%s5] sm:$0xff]
      %v935 = vld [vmem:[%s5 + $0x8] sm:$0xff]
      %v937 = vsel %vm506, %v444, 0
      %v940 = vsel %vm506, %v447, 0
      %v943 = vsel %vm506, %v452, 0
      %v946 = vsel %vm506, %v455, 0
      %v949 = vsel %vm506, %v460, 0
      %v952 = vsel %vm506, %v463, 0
      %v955 = vsel %vm506, %v468, 0
      %v958 = vsel %vm506, %v471, 0
      %v961 = vsel %vm506, %v476, 0
      %v964 = vsel %vm506, %v479, 0
      %v967 = vsel %vm506, %v484, 0
      %v970 = vsel %vm506, %v487, 0
      %v973 = vsel %vm506, %v492, 0
      %v976 = vsel %vm506, %v495, 0
      %v979 = vsel %vm506, %v500, 0
      %v982 = vsel %vm506, %v503, 0
      %984 = vmatprep.subr.mxu0 0.0
      %985 = vmatpush1.msra.mxu0 0.0
      %986 = vmatprep.subr.mxu0 0.0
      %987 = vmatpush1.msra.mxu0 0.0
      %988 = vmatprep.subr.mxu0 0.0
      %989 = vmatpush1.msra.mxu0 0.0
      %990 = vmatprep.subr.mxu0 0.0
      %991 = vmatpush1.msra.mxu0 0.0
      %992 = vmatprep.subr.mxu0 0.0
      %993 = vmatpush1.msra.mxu0 0.0
      %994 = vmatprep.subr.mxu0 0.0
      %995 = vmatpush1.msra.mxu0 0.0
      %996 = vmatprep.subr.mxu0 0.0
      %997 = vmatpush1.msra.mxu0 0.0
      %998 = vmatprep.subr.mxu0 0.0
      %999 = vmatpush1.msra.mxu0 0.0
      %1000 = vmatprep.subr.mxu0 0.0
      %1001 = vmatpush1.msra.mxu0 0.0
      %1002 = vmatprep.subr.mxu0 0.0
      %1003 = vmatpush1.msra.mxu0 0.0
      %1004 = vmatprep.subr.mxu0 0.0
      %1005 = vmatpush1.msra.mxu0 0.0
      %1006 = vmatprep.subr.mxu0 0.0
      %1007 = vmatpush1.msra.mxu0 0.0
      %1008 = vmatprep.subr.mxu0 0.0
      %1009 = vmatpush1.msra.mxu0 0.0
      %1010 = vmatprep.subr.mxu0 0.0
      %1011 = vmatpush1.msra.mxu0 0.0
      %1012 = vmatprep.subr.mxu0 0.0
      %1013 = vmatpush1.msra.mxu0 %v935
      %1014 = vmatprep.subr.mxu0 0.0
      %1015 = vmatpush1.msra.mxu0 %v934
      %1016 = vmatprep.subr.mxu0 0.0
      %1017 = vmatpush2.msra.mxu0 0.0
      %1018 = vmatprep.subr.mxu0 0.0
      %1019 = vmatpush2.msra.mxu0 0.0
      %1020 = vmatprep.subr.mxu0 0.0
      %1021 = vmatpush2.msra.mxu0 0.0
      %1022 = vmatprep.subr.mxu0 0.0
      %1023 = vmatpush2.msra.mxu0 0.0
      %1024 = vmatprep.subr.mxu0 0.0
      %1025 = vmatpush2.msra.mxu0 0.0
      %1026 = vmatprep.subr.mxu0 0.0
      %1027 = vmatpush2.msra.mxu0 0.0
      %1028 = vmatprep.subr.mxu0 0.0
      %1029 = vmatpush2.msra.mxu0 0.0
      %1030 = vmatprep.subr.mxu0 0.0
      %1031 = vmatpush2.msra.mxu0 0.0
      %1032 = vmatprep.subr.mxu0 0.0
      %1033 = vmatpush2.msra.mxu0 0.0
      %1034 = vmatprep.subr.mxu0 0.0
      %1035 = vmatpush2.msra.mxu0 0.0
      %1036 = vmatprep.subr.mxu0 0.0
      %1037 = vmatpush2.msra.mxu0 0.0
      %1038 = vmatprep.subr.mxu0 0.0
      %1039 = vmatpush2.msra.mxu0 0.0
      %1040 = vmatprep.subr.mxu0 0.0
      %1041 = vmatpush2.msra.mxu0 0.0
      %1042 = vmatprep.subr.mxu0 0.0
      %1043 = vmatpush2.msra.mxu0 0.0
      %1044 = vmatprep.subr.mxu0 0.0
      %1045 = vmatpush2.msra.mxu0 0.0
      %1046 = vmatprep.subr.mxu0 0.0
      %1047 = vmatpush2.msra.mxu0 0.0
      %1048 = vmatprep.mubr.f32.mxu0 0.0
      %1049 = vmatmul.mubr.f32.gmra.mxu0 %v937
      %v1050 = vpop.f32.mrf.mxu0
      %v1051 = vadd.f32 0.0, %v1050
      %v1052 = vpop.f32.mrf.mxu0
      %1053 = vmatprep.mubr.f32.mxu0 0.0
      %1054 = vmatmul.mubr.f32.gmra.mxu0 %v940
      %v1055 = vpop.f32.mrf.mxu0
      %v1056 = vadd.f32 0.0, %v1055
      %v1057 = vpop.f32.mrf.mxu0
      %1058 = vmatprep.mubr.f32.mxu0 0.0
      %1059 = vmatmul.mubr.f32.gmra.mxu0 %v943
      %v1060 = vpop.f32.mrf.mxu0
      %v1061 = vadd.f32 0.0, %v1060
      %v1062 = vpop.f32.mrf.mxu0
      %1063 = vmatprep.mubr.f32.mxu0 0.0
      %1064 = vmatmul.mubr.f32.gmra.mxu0 %v946
      %v1065 = vpop.f32.mrf.mxu0
      %v1066 = vadd.f32 0.0, %v1065
      %v1067 = vpop.f32.mrf.mxu0
      %1068 = vmatprep.mubr.f32.mxu0 0.0
      %1069 = vmatmul.mubr.f32.gmra.mxu0 %v949
      %v1070 = vpop.f32.mrf.mxu0
      %v1071 = vadd.f32 0.0, %v1070
      %v1072 = vpop.f32.mrf.mxu0
      %1073 = vmatprep.mubr.f32.mxu0 0.0
      %1074 = vmatmul.mubr.f32.gmra.mxu0 %v952
      %v1075 = vpop.f32.mrf.mxu0
      %v1076 = vadd.f32 0.0, %v1075
      %v1077 = vpop.f32.mrf.mxu0
      %1078 = vmatprep.mubr.f32.mxu0 0.0
      %1079 = vmatmul.mubr.f32.gmra.mxu0 %v955
      %v1080 = vpop.f32.mrf.mxu0
      %v1081 = vadd.f32 0.0, %v1080
      %v1082 = vpop.f32.mrf.mxu0
      %1083 = vmatprep.mubr.f32.mxu0 0.0
      %1084 = vmatmul.mubr.f32.gmra.mxu0 %v958
      %v1085 = vpop.f32.mrf.mxu0
      %v1086 = vadd.f32 0.0, %v1085
      %v1087 = vpop.f32.mrf.mxu0
      %1088 = vmatprep.mubr.f32.mxu0 0.0
      %1089 = vmatmul.mubr.f32.gmra.mxu0 %v961
      %v1090 = vpop.f32.mrf.mxu0
      %v1091 = vadd.f32 0.0, %v1090
      %v1092 = vpop.f32.mrf.mxu0
      %1093 = vmatprep.mubr.f32.mxu0 0.0
      %1094 = vmatmul.mubr.f32.gmra.mxu0 %v964
      %v1095 = vpop.f32.mrf.mxu0
      %v1096 = vadd.f32 0.0, %v1095
      %v1097 = vpop.f32.mrf.mxu0
      %1098 = vmatprep.mubr.f32.mxu0 0.0
      %1099 = vmatmul.mubr.f32.gmra.mxu0 %v967
      %v1100 = vpop.f32.mrf.mxu0
      %v1101 = vadd.f32 0.0, %v1100
      %v1102 = vpop.f32.mrf.mxu0
      %1103 = vmatprep.mubr.f32.mxu0 0.0
      %1104 = vmatmul.mubr.f32.gmra.mxu0 %v970
      %v1105 = vpop.f32.mrf.mxu0
      %v1106 = vadd.f32 0.0, %v1105
      %v1107 = vpop.f32.mrf.mxu0
      %1108 = vmatprep.mubr.f32.mxu0 0.0
      %1109 = vmatmul.mubr.f32.gmra.mxu0 %v973
      %v1110 = vpop.f32.mrf.mxu0
      %v1111 = vadd.f32 0.0, %v1110
      %v1112 = vpop.f32.mrf.mxu0
      %1113 = vmatprep.mubr.f32.mxu0 0.0
      %1114 = vmatmul.mubr.f32.gmra.mxu0 %v976
      %v1115 = vpop.f32.mrf.mxu0
      %v1116 = vadd.f32 0.0, %v1115
      %v1117 = vpop.f32.mrf.mxu0
      %1118 = vmatprep.mubr.f32.mxu0 0.0
      %1119 = vmatmul.mubr.f32.gmra.mxu0 %v979
      %v1120 = vpop.f32.mrf.mxu0
      %v1121 = vadd.f32 0.0, %v1120
      %v1122 = vpop.f32.mrf.mxu0
      %1123 = vmatprep.mubr.f32.mxu0 0.0
      %1124 = vmatmul.mubr.f32.gmra.mxu0 %v982
      %v1125 = vpop.f32.mrf.mxu0
      %v1126 = vadd.f32 0.0, %v1125
      %v1127 = vpop.f32.mrf.mxu0
      %1128 = vdwg.mxu0
      %vm1129 = vcmask 80896
      %v1130 = vsel %vm1129, %v1051, -inf
      %1131 = vmax.xlane.f32.xlu0 %v1130
      %v1132 = vpop.xlane.xlu0 %1131
      %v1133 = vsel %vm1129, %v1056, -inf
      %1134 = vmax.xlane.f32.xlu0 %v1133
      %v1135 = vpop.xlane.xlu0 %1134
      %v1136 = vsel %vm1129, %v1061, -inf
      %1137 = vmax.xlane.f32.xlu0 %v1136
      %v1138 = vpop.xlane.xlu0 %1137
      %v1139 = vsel %vm1129, %v1066, -inf
      %1140 = vmax.xlane.f32.xlu0 %v1139
      %v1141 = vpop.xlane.xlu0 %1140
      %v1142 = vsel %vm1129, %v1071, -inf
      %1143 = vmax.xlane.f32.xlu0 %v1142
      %v1144 = vpop.xlane.xlu0 %1143
      %v1145 = vsel %vm1129, %v1076, -inf
      %1146 = vmax.xlane.f32.xlu0 %v1145
      %v1147 = vpop.xlane.xlu0 %1146
      %v1148 = vsel %vm1129, %v1081, -inf
      %1149 = vmax.xlane.f32.xlu0 %v1148
      %v1150 = vpop.xlane.xlu0 %1149
      %v1151 = vsel %vm1129, %v1086, -inf
      %1152 = vmax.xlane.f32.xlu0 %v1151
      %v1153 = vpop.xlane.xlu0 %1152
      %v1154 = vsel %vm1129, %v1091, -inf
      %1155 = vmax.xlane.f32.xlu0 %v1154
      %v1156 = vpop.xlane.xlu0 %1155
      %v1157 = vsel %vm1129, %v1096, -inf
      %1158 = vmax.xlane.f32.xlu0 %v1157
      %v1159 = vpop.xlane.xlu0 %1158
      %v1160 = vsel %vm1129, %v1101, -inf
      %1161 = vmax.xlane.f32.xlu0 %v1160
      %v1162 = vpop.xlane.xlu0 %1161
      %v1163 = vsel %vm1129, %v1106, -inf
      %1164 = vmax.xlane.f32.xlu0 %v1163
      %v1165 = vpop.xlane.xlu0 %1164
      %v1166 = vsel %vm1129, %v1111, -inf
      %1167 = vmax.xlane.f32.xlu0 %v1166
      %v1168 = vpop.xlane.xlu0 %1167
      %v1169 = vsel %vm1129, %v1116, -inf
      %1170 = vmax.xlane.f32.xlu0 %v1169
      %v1171 = vpop.xlane.xlu0 %1170
      %v1172 = vsel %vm1129, %v1121, -inf
      %1173 = vmax.xlane.f32.xlu0 %v1172
      %v1174 = vpop.xlane.xlu0 %1173
      %v1175 = vsel %vm1129, %v1126, -inf
      %1176 = vmax.xlane.f32.xlu0 %v1175
      %v1177 = vpop.xlane.xlu0 %1176
      %v1178 = vsub.f32 %v1051, %v1132
      %v1179 = vsub.f32 %v1056, %v1135
      %v1180 = vsub.f32 %v1061, %v1138
      %v1181 = vsub.f32 %v1066, %v1141
      %v1182 = vsub.f32 %v1071, %v1144
      %v1183 = vsub.f32 %v1076, %v1147
      %v1184 = vsub.f32 %v1081, %v1150
      %v1185 = vsub.f32 %v1086, %v1153
      %v1186 = vsub.f32 %v1091, %v1156
      %v1187 = vsub.f32 %v1096, %v1159
      %v1188 = vsub.f32 %v1101, %v1162
      %v1189 = vsub.f32 %v1106, %v1165
      %v1190 = vsub.f32 %v1111, %v1168
      %v1191 = vsub.f32 %v1116, %v1171
      %v1192 = vsub.f32 %v1121, %v1174
      %v1193 = vsub.f32 %v1126, %v1177
      %v1194 = vmul.f32 %v1178, 1.442695
      %v1195 = vpow.pop %v1194
      %v1196 = vmul.f32 %v1179, 1.442695
      %v1197 = vpow.pop %v1196
      %v1198 = vmul.f32 %v1180, 1.442695
      %v1199 = vpow.pop %v1198
      %v1200 = vmul.f32 %v1181, 1.442695
      %v1201 = vpow.pop %v1200
      %v1202 = vmul.f32 %v1182, 1.442695
      %v1203 = vpow.pop %v1202
      %v1204 = vmul.f32 %v1183, 1.442695
      %v1205 = vpow.pop %v1204
      %v1206 = vmul.f32 %v1184, 1.442695
      %v1207 = vpow.pop %v1206
      %v1208 = vmul.f32 %v1185, 1.442695
      %v1209 = vpow.pop %v1208
      %v1210 = vmul.f32 %v1186, 1.442695
      %v1211 = vpow.pop %v1210
      %v1212 = vmul.f32 %v1187, 1.442695
      %v1213 = vpow.pop %v1212
      %v1214 = vmul.f32 %v1188, 1.442695
      %v1215 = vpow.pop %v1214
      %v1216 = vmul.f32 %v1189, 1.442695
      %v1217 = vpow.pop %v1216
      %v1218 = vmul.f32 %v1190, 1.442695
      %v1219 = vpow.pop %v1218
      %v1220 = vmul.f32 %v1191, 1.442695
      %v1221 = vpow.pop %v1220
      %v1222 = vmul.f32 %v1192, 1.442695
      %v1223 = vpow.pop %v1222
      %v1224 = vmul.f32 %v1193, 1.442695
      %v1225 = vpow.pop %v1224
      %v1226 = vsel %vm1129, %v1195, 0.0
      %1227 = vadd.xlane.f32.xlu0 %v1226
      %v1228 = vpop.xlane.xlu0 %1227
      %v1229 = vsel %vm1129, %v1197, 0.0
      %1230 = vadd.xlane.f32.xlu0 %v1229
      %v1231 = vpop.xlane.xlu0 %1230
      %v1232 = vsel %vm1129, %v1199, 0.0
      %1233 = vadd.xlane.f32.xlu0 %v1232
      %v1234 = vpop.xlane.xlu0 %1233
      %v1235 = vsel %vm1129, %v1201, 0.0
      %1236 = vadd.xlane.f32.xlu0 %v1235
      %v1237 = vpop.xlane.xlu0 %1236
      %v1238 = vsel %vm1129, %v1203, 0.0
      %1239 = vadd.xlane.f32.xlu0 %v1238
      %v1240 = vpop.xlane.xlu0 %1239
      %v1241 = vsel %vm1129, %v1205, 0.0
      %1242 = vadd.xlane.f32.xlu0 %v1241
      %v1243 = vpop.xlane.xlu0 %1242
      %v1244 = vsel %vm1129, %v1207, 0.0
      %1245 = vadd.xlane.f32.xlu0 %v1244
      %v1246 = vpop.xlane.xlu0 %1245
      %v1247 = vsel %vm1129, %v1209, 0.0
      %1248 = vadd.xlane.f32.xlu0 %v1247
      %v1249 = vpop.xlane.xlu0 %1248
      %v1250 = vsel %vm1129, %v1211, 0.0
      %1251 = vadd.xlane.f32.xlu0 %v1250
      %v1252 = vpop.xlane.xlu0 %1251
      %v1253 = vsel %vm1129, %v1213, 0.0
      %1254 = vadd.xlane.f32.xlu0 %v1253
      %v1255 = vpop.xlane.xlu0 %1254
      %v1256 = vsel %vm1129, %v1215, 0.0
      %1257 = vadd.xlane.f32.xlu0 %v1256
      %v1258 = vpop.xlane.xlu0 %1257
      %v1259 = vsel %vm1129, %v1217, 0.0
      %1260 = vadd.xlane.f32.xlu0 %v1259
      %v1261 = vpop.xlane.xlu0 %1260
      %v1262 = vsel %vm1129, %v1219, 0.0
      %1263 = vadd.xlane.f32.xlu0 %v1262
      %v1264 = vpop.xlane.xlu0 %1263
      %v1265 = vsel %vm1129, %v1221, 0.0
      %1266 = vadd.xlane.f32.xlu0 %v1265
      %v1267 = vpop.xlane.xlu0 %1266
      %v1268 = vsel %vm1129, %v1223, 0.0
      %1269 = vadd.xlane.f32.xlu0 %v1268
      %v1270 = vpop.xlane.xlu0 %1269
      %v1271 = vsel %vm1129, %v1225, 0.0
      %1272 = vadd.xlane.f32.xlu0 %v1271
      %v1273 = vpop.xlane.xlu0 %1272
      %v1274 = vrcp.pop %v1228
      %v1275 = vmul.f32 %v1195, %v1274
      %v1276 = vrcp.pop %v1231
      %v1277 = vmul.f32 %v1197, %v1276
      %v1278 = vrcp.pop %v1234
      %v1279 = vmul.f32 %v1199, %v1278
      %v1280 = vrcp.pop %v1237
      %v1281 = vmul.f32 %v1201, %v1280
      %v1282 = vrcp.pop %v1240
      %v1283 = vmul.f32 %v1203, %v1282
      %v1284 = vrcp.pop %v1243
      %v1285 = vmul.f32 %v1205, %v1284
      %v1286 = vrcp.pop %v1246
      %v1287 = vmul.f32 %v1207, %v1286
      %v1288 = vrcp.pop %v1249
      %v1289 = vmul.f32 %v1209, %v1288
      %v1290 = vrcp.pop %v1252
      %v1291 = vmul.f32 %v1211, %v1290
      %v1292 = vrcp.pop %v1255
      %v1293 = vmul.f32 %v1213, %v1292
      %v1294 = vrcp.pop %v1258
      %v1295 = vmul.f32 %v1215, %v1294
      %v1296 = vrcp.pop %v1261
      %v1297 = vmul.f32 %v1217, %v1296
      %v1298 = vrcp.pop %v1264
      %v1299 = vmul.f32 %v1219, %v1298
      %v1300 = vrcp.pop %v1267
      %v1301 = vmul.f32 %v1221, %v1300
      %v1302 = vrcp.pop %v1270
      %v1303 = vmul.f32 %v1223, %v1302
      %v1304 = vrcp.pop %v1273
      %v1305 = vmul.f32 %v1225, %v1304
      %1306 = vst.msk [vmem:[%s334] sm:$0xff] %vm1129, %v1275
      %1307 = vst.msk [vmem:[%s334 + $0x8] sm:$0xff] %vm1129, %v1277
      %1308 = vst.msk [vmem:[%s334 + $0x10] sm:$0xff] %vm1129, %v1279
      %1309 = vst.msk [vmem:[%s334 + $0x18] sm:$0xff] %vm1129, %v1281
      %1310 = vst.msk [vmem:[%s334 + $0x20] sm:$0xff] %vm1129, %v1283
      %1311 = vst.msk [vmem:[%s334 + $0x28] sm:$0xff] %vm1129, %v1285
      %1312 = vst.msk [vmem:[%s334 + $0x30] sm:$0xff] %vm1129, %v1287
      %1313 = vst.msk [vmem:[%s334 + $0x38] sm:$0xff] %vm1129, %v1289
      %1314 = vst.msk [vmem:[%s334 + $0x40] sm:$0xff] %vm1129, %v1291
      %1315 = vst.msk [vmem:[%s334 + $0x48] sm:$0xff] %vm1129, %v1293
      %1316 = vst.msk [vmem:[%s334 + $0x50] sm:$0xff] %vm1129, %v1295
      %1317 = vst.msk [vmem:[%s334 + $0x58] sm:$0xff] %vm1129, %v1297
      %1318 = vst.msk [vmem:[%s334 + $0x60] sm:$0xff] %vm1129, %v1299
      %1319 = vst.msk [vmem:[%s334 + $0x68] sm:$0xff] %vm1129, %v1301
      %1320 = vst.msk [vmem:[%s334 + $0x70] sm:$0xff] %vm1129, %v1303
      %1321 = vst.msk [vmem:[%s334 + $0x78] sm:$0xff] %vm1129, %v1305
      %s1322 = smul.u32 16, %s20
      %p1323 = scmp.lt.s32.totalorder %s1322, 31
      %s1324 = scalar_select %p1323, %s1322, 31
      %s1325 = smul.addr %s1324, 8
      %s1326 = scalar_lea.vmem %s6, %s1325
      %s1327 = smul.u32 16, %s20
      %p1328 = scmp.lt.s32.totalorder %s1327, 31
      %s1329 = scalar_select %p1328, %s1327, 31
      %s1330 = smul.addr %s1329, 8
      %s1331 = scalar_lea.vmem %s7, %s1330
      %s1332 = smul.u32 16, %s20
      %p1333 = scmp.lt.s32.totalorder %s1332, 31
      %s1334 = scalar_select %p1333, %s1332, 31
      %s1335 = smul.addr %s1334, 8
      %s1336 = scalar_lea.vmem %s8, %s1335
      // Predicated region
      $region45: #{f_mlp_forward.1} parent=43 // pred_check
        %p1337 = pneg %p169
      $region46: #{f_mlp_forward.1} parent=43 // pred_check_branch
        %1339 = sbr.rel (%p1337) target = $region48
      $region47: #{f_mlp_forward.1} parent=43 // pred_region
        %s1340 = smul.u32 16, %s20
      $region48: #{f_mlp_forward.1} parent=43 // pred_fallthru
        _
      // Predicated region
      $region49: #{f_mlp_forward.1} parent=43 // pred_check
        %p1341 = pneg %p195
      $region50: #{f_mlp_forward.1} parent=43 // pred_check_branch
        %1343 = sbr.rel (%p1341) target = $region52
      $region51: #{f_mlp_forward.1} parent=43 // pred_region
        %s1344 = smul.u32 16, %s20
      $region52: #{f_mlp_forward.1} parent=43 // pred_fallthru
        _
      // Predicated region
      $region53: #{f_mlp_forward.1} parent=43 // pred_check
        %p1345 = pneg %p221
      $region54: #{f_mlp_forward.1} parent=43 // pred_check_branch
        %1347 = sbr.rel (%p1345) target = $region56
      $region55: #{f_mlp_forward.1} parent=43 // pred_region
        %s1348 = smul.u32 16, %s20
      $region56: #{f_mlp_forward.1} parent=43 // pred_fallthru
        _
    $region44: #{f_mlp_forward.1} parent=5 // pred_fallthru
      _
    %p1349 = scmp.le.s32.totalorder 2, %s15
    // Predicated region
    $region57: #{f_mlp_forward.1} parent=5 // pred_check
      %p1350 = pneg %p1349
    $region58: #{f_mlp_forward.1} parent=5 // pred_check_branch
      %1352 = sbr.rel (%p1350) target = $region60
    $region59: #{f_mlp_forward.1} parent=5 // pred_region
      %s1353 = ssub.s32 %s15, 2
      // Predicated region
      $region61: #{f_mlp_forward.1} parent=59 // pred_check
        %p1354 = pneg %p175
      $region62: #{f_mlp_forward.1} parent=59 // pred_check_branch
        %1356 = sbr.rel (%p1354) target = $region64
      $region63: #{f_mlp_forward.1} parent=59 // pred_region
        %s1357 = smul.u32 16, %s21
        %p1358 = scmp.lt.s32.totalorder %s1357, 31
        %s1359 = scalar_select %p1358, %s1357, 31
        %s1360 = smul.addr %s1359, 8
        %s1361 = scalar_lea.vmem %s6, %s1360
      $region64: #{f_mlp_forward.1} parent=59 // pred_fallthru
        _
      // Predicated region
      $region65: #{f_mlp_forward.1} parent=59 // pred_check
        %p1362 = pneg %p201
      $region66: #{f_mlp_forward.1} parent=59 // pred_check_branch
        %1364 = sbr.rel (%p1362) target = $region68
      $region67: #{f_mlp_forward.1} parent=59 // pred_region
        %s1365 = smul.u32 16, %s21
        %p1366 = scmp.lt.s32.totalorder %s1365, 31
        %s1367 = scalar_select %p1366, %s1365, 31
        %s1368 = smul.addr %s1367, 8
        %s1369 = scalar_lea.vmem %s7, %s1368
      $region68: #{f_mlp_forward.1} parent=59 // pred_fallthru
        _
      // Predicated region
      $region69: #{f_mlp_forward.1} parent=59 // pred_check
        %p1370 = pneg %p227
      $region70: #{f_mlp_forward.1} parent=59 // pred_check_branch
        %1372 = sbr.rel (%p1370) target = $region72
      $region71: #{f_mlp_forward.1} parent=59 // pred_region
        %s1373 = smul.u32 16, %s21
        %p1374 = scmp.lt.s32.totalorder %s1373, 31
        %s1375 = scalar_select %p1374, %s1373, 31
        %s1376 = smul.addr %s1375, 8
        %s1377 = scalar_lea.vmem %s8, %s1376
      $region72: #{f_mlp_forward.1} parent=59 // pred_fallthru
        _
    $region60: #{f_mlp_forward.1} parent=5 // pred_fallthru
      _
  $region6: #{f_mlp_forward.1} parent=0 // loop_footer
    %s19 = sadd.s32 1, %s15
  $region7: #{f_mlp_forward.1} parent=0 // loop_footer_branch
    %14 = sbr.rel target = $region3
  $region8: #{f_mlp_forward.1} parent=0 // loop_exit
    _

</llo_original>
